<compile_context>
chip_gen: v5e
topology: v5e:2x2
jax: 0.10.0
libtpu: 0.0.40
codegen_flags: <defaults>
</compile_context>

<pallas_src>
import jax
import jax.numpy as jnp
from jax.experimental import pallas as pl
from jax.experimental.pallas import tpu as pltpu


def _round_up(a, m):
    return (a + m - 1) // m * m


def _film_kernel_fused(x_ref, z_ref, wv_ref, wzz_ref, bv_ref, bzz_ref, o_ref):
    # x_ref:   (1, Cin,  TL)      z_ref:   (1, Cctx, TL)
    # wv_ref:  (Cout, Cin)        wzz_ref: (2*Cout, Cctx)  [scale ; shift]
    # bv_ref:  (Cout, 1)          bzz_ref: (2*Cout, 1)
    # o_ref:   (1, Cout, TL)
    x = x_ref[0]                       # (Cin, TL)
    z = z_ref[0]                       # (Cctx, TL)
    cout = bv_ref.shape[0]

    value = jnp.dot(wv_ref[...], x, preferred_element_type=jnp.float32) + bv_ref[...]
    # One fused matmul for scale & shift (shared LHS z) -> (2*Cout, TL).
    ss = jnp.dot(wzz_ref[...], z, preferred_element_type=jnp.float32) + bzz_ref[...]
    scale = ss[:cout]                  # sublane-aligned views (Cout % 8 == 0)
    shift = ss[cout:]

    o_ref[0] = (scale * value + shift).astype(o_ref.dtype)


def _film_kernel_split(x_ref, z_ref, wv_ref, ws_ref, wsh_ref,
                       bv_ref, bs_ref, bsh_ref, o_ref):
    # Fallback when Cout % 8 != 0 (fused split would cross a sublane tile).
    x = x_ref[0]
    z = z_ref[0]
    value = jnp.dot(wv_ref[...], x, preferred_element_type=jnp.float32) + bv_ref[...]
    scale = jnp.dot(ws_ref[...], z, preferred_element_type=jnp.float32) + bs_ref[...]
    shift = jnp.dot(wsh_ref[...], z, preferred_element_type=jnp.float32) + bsh_ref[...]
    o_ref[0] = (scale * value + shift).astype(o_ref.dtype)


def ve_film_layer(x, z, params):
    """x: (B, Cin, L), z: (B, Cctx, L)  ->  (B, Cout, L)   (NCL, dtype of x)."""
    wv, bv = params["value_w"], params["value_b"]     # (Cout, Cin), (Cout,)
    ws, bs = params["scale_w"], params["scale_b"]     # (Cout, Cctx), (Cout,)
    wsh, bsh = params["shift_w"], params["shift_b"]   # (Cout, Cctx), (Cout,)

    B, Cin, L = x.shape
    Bz, Cctx, Lz = z.shape
    assert Bz == B and Lz == L
    Cout = wv.shape[0]

    out_dtype = x.dtype
    ix = jnp.dtype(x.dtype).itemsize
    iz = jnp.dtype(z.dtype).itemsize
    io = jnp.dtype(out_dtype).itemsize
    iw = jnp.dtype(wv.dtype).itemsize

    # ---- generation-aware VMEM target -------------------------------------
    try:
        vmem_cap = int(pltpu.get_tpu_info().vmem_capacity_bytes)
    except Exception:  # interpret mode / unknown chip
        vmem_cap = 128 << 20
    # v5e/v6e: 128 MiB physical -> allow up to 48 MiB scoped.
    # v7x:      64 MiB per TC   -> stay at <=30 MiB to avoid spills/OOM.
    vmem_target = (48 << 20) if vmem_cap >= (100 << 20) else (30 << 20)

    # Weights stay resident across the grid (default pipeline keeps 2 copies).
    weight_bytes = 2 * iw * (Cout * Cin + 2 * Cout * Cctx + 3 * Cout)

    # ---- lane-tile sizing, driven by the VMEM budget -----------------------
    # Per lane: double-buffered x/z/out tiles + f32 intermediates (value, ss, y).
    per_lane = 2 * (ix * Cin + iz * Cctx + io * Cout) + 4 * 4 * Cout
    avail = max(vmem_target - weight_bytes - (4 << 20), 2 << 20)
    tl_budget = max(128, (avail // per_lane) // 128 * 128)
    tl_budget = min(tl_budget, 32768)          # diminishing returns past ~32K lanes

    if L <= 128:
        TL = L                                  # full-dim block, no raggedness
    else:
        TL = min(tl_budget, max(128, (L // 128) * 128))
        # Keep >= 4 grid steps so both v7x TensorCores get work
        # (harmless on single-TC v5e/v6e).
        min_steps = 4
        if B * pl.cdiv(L, TL) < min_steps:
            want_tiles = -(-min_steps // B)
            TL = min(TL, max(128, _round_up(-(-L // want_tiles), 128)))
            TL = min(TL, max(128, (L // 128) * 128))

    grid = (B, pl.cdiv(L, TL))

    # Actual VMEM requirement with the chosen TL (+ headroom), clamped.
    tile_bytes = TL * (ix * Cin + iz * Cctx + io * Cout)
    vmem_needed = 2 * tile_bytes + 4 * 4 * Cout * TL + weight_bytes + (2 << 20)
    vmem_limit = int(min(max(vmem_needed, 8 << 20), vmem_target))

    flops = 2 * B * L * Cout * (Cin + 2 * Cctx)
    bytes_accessed = (B * L * (ix * Cin + iz * Cctx + io * Cout)
                      + iw * (Cout * Cin + 2 * Cout * Cctx + 3 * Cout))
    cost = pl.CostEstimate(flops=flops, transcendentals=0,
                           bytes_accessed=int(bytes_accessed))

    x_spec = pl.BlockSpec((1, Cin, TL), lambda b, l: (b, 0, l))
    z_spec = pl.BlockSpec((1, Cctx, TL), lambda b, l: (b, 0, l))
    o_spec = pl.BlockSpec((1, Cout, TL), lambda b, l: (b, 0, l))
    cparams = pltpu.CompilerParams(
        dimension_semantics=("parallel", "parallel"),
        vmem_limit_bytes=vmem_limit)

    if Cout % 8 == 0:
        # Fused scale+shift matmul; the ss[:Cout]/ss[Cout:] split is a free
        # sublane-aligned view.
        wzz = jnp.concatenate([ws, wsh], axis=0)                     # (2*Cout, Cctx)
        bzz = jnp.concatenate([bs, bsh], axis=0).reshape(2 * Cout, 1)
        bv2 = bv.reshape(Cout, 1)
        return pl.pallas_call(
            _film_kernel_fused,
            out_shape=jax.ShapeDtypeStruct((B, Cout, L), out_dtype),
            grid_spec=pltpu.PrefetchScalarGridSpec(
                num_scalar_prefetch=0,
                grid=grid,
                in_specs=[
                    x_spec, z_spec,
                    pl.BlockSpec((Cout, Cin), lambda b, l: (0, 0)),      # value W
                    pl.BlockSpec((2 * Cout, Cctx), lambda b, l: (0, 0)), # scale+shift W
                    pl.BlockSpec((Cout, 1), lambda b, l: (0, 0)),        # value b
                    pl.BlockSpec((2 * Cout, 1), lambda b, l: (0, 0)),    # scale+shift b
                ],
                out_specs=o_spec),
            compiler_params=cparams,
            cost_estimate=cost,
        )(x, z, wv, wzz, bv2, bzz)

    # Cout not sublane-aligned: two separate matmuls (avoids per-step relayout).
    return pl.pallas_call(
        _film_kernel_split,
        out_shape=jax.ShapeDtypeStruct((B, Cout, L), out_dtype),
        grid_spec=pltpu.PrefetchScalarGridSpec(
            num_scalar_prefetch=0,
            grid=grid,
            in_specs=[
                x_spec, z_spec,
                pl.BlockSpec((Cout, Cin), lambda b, l: (0, 0)),
                pl.BlockSpec((Cout, Cctx), lambda b, l: (0, 0)),
                pl.BlockSpec((Cout, Cctx), lambda b, l: (0, 0)),
                pl.BlockSpec((Cout, 1), lambda b, l: (0, 0)),
                pl.BlockSpec((Cout, 1), lambda b, l: (0, 0)),
                pl.BlockSpec((Cout, 1), lambda b, l: (0, 0)),
            ],
            out_specs=o_spec),
        compiler_params=cparams,
        cost_estimate=cost,
    )(x, z, wv, ws, wsh,
      bv.reshape(Cout, 1), bs.reshape(Cout, 1), bsh.reshape(Cout, 1))


def init_params(key, input_size, output_size, context_size):
    ks = jax.random.split(key, 6)

    def unif(k, shape, fan_in):
        bound = 1.0 / jnp.sqrt(fan_in)
        return jax.random.uniform(k, shape, jnp.float32, -bound, bound)

    return {
        "scale_w": unif(ks[0], (output_size, context_size), context_size),
        "scale_b": unif(ks[1], (output_size,), context_size),
        "shift_w": unif(ks[2], (output_size, context_size), context_size),
        "shift_b": unif(ks[3], (output_size,), context_size),
        "value_w": unif(ks[4], (output_size, input_size), input_size),
        "value_b": unif(ks[5], (output_size,), input_size),
    }


def reference(x, z, p):
    # Pure-JAX reference of the PyTorch forward (1x1 Conv1d == einsum).
    value = jnp.einsum("oc,bcl->bol", p["value_w"], x) + p["value_b"][None, :, None]
    scale = jnp.einsum("oc,bcl->bol", p["scale_w"], z) + p["scale_b"][None, :, None]
    shift = jnp.einsum("oc,bcl->bol", p["shift_w"], z) + p["shift_b"][None, :, None]
    return scale * value + shift


if __name__ == "__main__":
    B, INPUT, CTX, OUT, L = 2, 4, 8, 32, 16

    key = jax.random.PRNGKey(0)
    kx, kz, kp = jax.random.split(key, 3)
    x = jax.random.normal(kx, (B, INPUT, L), jnp.float32)
    z = jax.random.normal(kz, (B, CTX, L), jnp.float32)
    params = init_params(kp, INPUT, OUT, CTX)

    y = jax.block_until_ready(ve_film_layer(x, z, params))

    y_ref = reference(x, z, params)
    assert y.shape == (B, OUT, L)
    assert jnp.allclose(y, y_ref, atol=1e-5, rtol=1e-5)

    print("KERNEL_OK")
</pallas_src>

<mosaic_0001>
module attributes {stable_mosaic.version = 11 : i64} {
  func.func @_film_kernel_fused(%arg0: i32, %arg1: i32, %arg2: memref<1x4x16xf32, #tpu.memory_space<vmem>>, %arg3: memref<1x8x16xf32, #tpu.memory_space<vmem>>, %arg4: memref<32x4xf32, #tpu.memory_space<vmem>>, %arg5: memref<64x8xf32, #tpu.memory_space<vmem>>, %arg6: memref<32x1xf32, #tpu.memory_space<vmem>>, %arg7: memref<64x1xf32, #tpu.memory_space<vmem>>, %arg8: memref<1x32x16xf32, #tpu.memory_space<vmem>>) attributes {dimension_semantics = [#tpu.dimension_semantics<parallel>, #tpu.dimension_semantics<parallel>], iteration_bounds = array<i64: 2, 1>, scalar_prefetch = 0 : i64, scratch_operands = 0 : i64, tpu.core_type = #tpu.core_type<tc>, window_params = [{transform_indices = @transform_0, window_bounds = array<i64: 1, 4, 16>}, {transform_indices = @transform_1, window_bounds = array<i64: 1, 8, 16>}, {pipeline_mode = #tpu.pipeline_mode<synchronous>, transform_indices = @transform_2, window_bounds = array<i64: 32, 4>}, {pipeline_mode = #tpu.pipeline_mode<synchronous>, transform_indices = @transform_3, window_bounds = array<i64: 64, 8>}, {pipeline_mode = #tpu.pipeline_mode<synchronous>, transform_indices = @transform_4, window_bounds = array<i64: 32, 1>}, {pipeline_mode = #tpu.pipeline_mode<synchronous>, transform_indices = @transform_5, window_bounds = array<i64: 64, 1>}, {transform_indices = @transform_6, window_bounds = array<i64: 1, 32, 16>}]} {
    %c0 = arith.constant 0 : index
    %c0_0 = arith.constant 0 : index
    %c0_1 = arith.constant 0 : index
    %0 = vector.load %arg2[%c0, %c0_0, %c0_1] : memref<1x4x16xf32, #tpu.memory_space<vmem>>, vector<1x4x16xf32>
    %1 = vector.shape_cast %0 : vector<1x4x16xf32> to vector<4x16xf32>
    %c0_2 = arith.constant 0 : index
    %c0_3 = arith.constant 0 : index
    %c0_4 = arith.constant 0 : index
    %2 = vector.load %arg3[%c0_2, %c0_3, %c0_4] : memref<1x8x16xf32, #tpu.memory_space<vmem>>, vector<1x8x16xf32>
    %3 = vector.shape_cast %2 : vector<1x8x16xf32> to vector<8x16xf32>
    %c0_5 = arith.constant 0 : index
    %c0_6 = arith.constant 0 : index
    %4 = vector.load %arg4[%c0_5, %c0_6] : memref<32x4xf32, #tpu.memory_space<vmem>>, vector<32x4xf32>
    %cst = arith.constant dense<0.000000e+00> : vector<32x16xf32>
    %5 = tpu.matmul %4, %1, %cst {dimension_numbers = #tpu.dot_dimension_numbers<[1], [0], [0], [1], [0, 0, 1, 1], [], []>} : vector<32x4xf32>, vector<4x16xf32>, vector<32x16xf32> -> vector<32x16xf32>
    %c0_7 = arith.constant 0 : index
    %c0_8 = arith.constant 0 : index
    %6 = vector.load %arg6[%c0_7, %c0_8] : memref<32x1xf32, #tpu.memory_space<vmem>>, vector<32x1xf32>
    %7 = vector.broadcast %6 : vector<32x1xf32> to vector<32x16xf32>
    %8 = arith.addf %5, %7 : vector<32x16xf32>
    %c0_9 = arith.constant 0 : index
    %c0_10 = arith.constant 0 : index
    %9 = vector.load %arg5[%c0_9, %c0_10] : memref<64x8xf32, #tpu.memory_space<vmem>>, vector<64x8xf32>
    %cst_11 = arith.constant dense<0.000000e+00> : vector<64x16xf32>
    %10 = tpu.matmul %9, %3, %cst_11 {dimension_numbers = #tpu.dot_dimension_numbers<[1], [0], [0], [1], [0, 0, 1, 1], [], []>} : vector<64x8xf32>, vector<8x16xf32>, vector<64x16xf32> -> vector<64x16xf32>
    %c0_12 = arith.constant 0 : index
    %c0_13 = arith.constant 0 : index
    %11 = vector.load %arg7[%c0_12, %c0_13] : memref<64x1xf32, #tpu.memory_space<vmem>>, vector<64x1xf32>
    %12 = vector.broadcast %11 : vector<64x1xf32> to vector<64x16xf32>
    %13 = arith.addf %10, %12 : vector<64x16xf32>
    %14 = vector.extract_strided_slice %13 {offsets = [0, 0], sizes = [32, 16], strides = [1, 1]} : vector<64x16xf32> to vector<32x16xf32>
    %15 = vector.extract_strided_slice %13 {offsets = [32, 0], sizes = [32, 16], strides = [1, 1]} : vector<64x16xf32> to vector<32x16xf32>
    %16 = arith.mulf %14, %8 : vector<32x16xf32>
    %17 = arith.addf %16, %15 : vector<32x16xf32>
    %c0_14 = arith.constant 0 : index
    %c0_15 = arith.constant 0 : index
    %c0_16 = arith.constant 0 : index
    %18 = vector.load %arg8[%c0_14, %c0_15, %c0_16] : memref<1x32x16xf32, #tpu.memory_space<vmem>>, vector<1x32x16xf32>
    %19 = vector.shape_cast %18 : vector<1x32x16xf32> to vector<32x16xf32>
    %20 = vector.shape_cast %17 : vector<32x16xf32> to vector<1x32x16xf32>
    tpu.vector_store %arg8[%c0_14, %c0_15, %c0_16], %20 {strides = array<i32>} : memref<1x32x16xf32, #tpu.memory_space<vmem>>, vector<1x32x16xf32>,
    return
  }
  func.func @transform_0(%arg0: i32, %arg1: i32) -> (i32, i32, i32) {
    %c0_i32 = arith.constant 0 : i32
    %c0_i32_0 = arith.constant 0 : i32
    return %arg0, %c0_i32, %arg1 : i32, i32, i32
  }
  func.func @transform_1(%arg0: i32, %arg1: i32) -> (i32, i32, i32) {
    %c0_i32 = arith.constant 0 : i32
    %c0_i32_0 = arith.constant 0 : i32
    return %arg0, %c0_i32, %arg1 : i32, i32, i32
  }
  func.func @transform_2(%arg0: i32, %arg1: i32) -> (i32, i32) {
    %c0_i32 = arith.constant 0 : i32
    %c0_i32_0 = arith.constant 0 : i32
    %c0_i32_1 = arith.constant 0 : i32
    return %c0_i32, %c0_i32_0 : i32, i32
  }
  func.func @transform_3(%arg0: i32, %arg1: i32) -> (i32, i32) {
    %c0_i32 = arith.constant 0 : i32
    %c0_i32_0 = arith.constant 0 : i32
    %c0_i32_1 = arith.constant 0 : i32
    return %c0_i32, %c0_i32_0 : i32, i32
  }
  func.func @transform_4(%arg0: i32, %arg1: i32) -> (i32, i32) {
    %c0_i32 = arith.constant 0 : i32
    %c0_i32_0 = arith.constant 0 : i32
    %c0_i32_1 = arith.constant 0 : i32
    return %c0_i32, %c0_i32_0 : i32, i32
  }
  func.func @transform_5(%arg0: i32, %arg1: i32) -> (i32, i32) {
    %c0_i32 = arith.constant 0 : i32
    %c0_i32_0 = arith.constant 0 : i32
    %c0_i32_1 = arith.constant 0 : i32
    return %c0_i32, %c0_i32_0 : i32, i32
  }
  func.func @transform_6(%arg0: i32, %arg1: i32) -> (i32, i32, i32) {
    %c0_i32 = arith.constant 0 : i32
    %c0_i32_0 = arith.constant 0 : i32
    return %arg0, %c0_i32, %arg1 : i32, i32, i32
  }
}

</mosaic_0001>

<llo_original>
// kernel: tpu_custom_call.1
$region0: #{tpu_custom_call.1}
  #allocation0 [shape = 'u32[]', space=smem, size = 0x4, offset = 0x4, fixed_abs, tag = 'smem constant byte address 0x4 - core index']
  #allocation1 [shape = 'u32[72,128]{1,0:T(1,128)}', space=vmem, size = 0x9000, scoped, tag = 'internal scratch']
  %s0 = inlined_call_operand.vmem [shape: f32[2,4,16], index: 0, kind: input, shape index: {}]
  %s1 = inlined_call_operand.vmem [shape: f32[2,8,16], index: 1, kind: input, shape index: {}]
  %s2 = inlined_call_operand.vmem [shape: f32[32,4], index: 2, kind: input, shape index: {}]
  %s3 = inlined_call_operand.vmem [shape: f32[64,8], index: 3, kind: input, shape index: {}]
  %s4 = inlined_call_operand.vmem [shape: f32[32,1], index: 4, kind: input, shape index: {}]
  %s5 = inlined_call_operand.vmem [shape: f32[64,1], index: 5, kind: input, shape index: {}]
  %s6 = inlined_call_operand.vmem [shape: f32[2,32,16], index: 6, kind: output, shape index: {}]
  %s7 = sld [smem:[#allocation0]]
  $region57: #{tpu_custom_call.1} parent=0
    _
  %s9 = ssub.s32 1, %s7
  %s10 = scalar_select 0, %s9, %s7
  loop: start=0, step=1, limit=4
  $region2: #{tpu_custom_call.1} parent=0 // loop_pre_header
    _
  $region3: #{tpu_custom_call.1} parent=0 // loop_header
    %s12 = sphi 0, %s16
    %p13 = scmp.ge.s32.totalorder %s12, 4
    %s19 = sphi 0, %s31
    %s20 = sphi 0, %s27
    %s21 = sphi 0, %s19
    %s22 = sphi 0, %s20
    %s23 = sphi 0, %s21
    %s24 = sphi 0, %s22
    %s36 = sphi 0, %s38
    %s39 = sphi 0, %s36
    %s40 = sphi 0, %s39
    %s56 = sphi 0, %s40
    %s64 = sphi 0, %s66
    %s67 = sphi 0, %s64
    %s68 = sphi 0, %s67
    %s84 = sphi 0, %s68
    %s88 = sphi 0, %s88
    %s90 = sphi 0, %s88
    %s91 = sphi 0, %s90
    %s105 = sphi 0, %s91
    %s109 = sphi 0, %s109
    %s111 = sphi 0, %s109
    %s112 = sphi 0, %s111
    %s126 = sphi 0, %s112
    %s130 = sphi 0, %s130
    %s132 = sphi 0, %s130
    %s133 = sphi 0, %s132
    %s147 = sphi 0, %s133
    %s151 = sphi 0, %s151
    %s153 = sphi 0, %s151
    %s154 = sphi 0, %s153
    %s168 = sphi 0, %s154
    %s176 = sphi 0, %s178
    %s179 = sphi 0, %s176
    %s180 = sphi 0, %s179
    %s196 = sphi 0, %s180
  $region4: #{tpu_custom_call.1} parent=0 // loop_header_branch
    %15 = sbr.rel (%p13) target = $region8
  $region5: #{tpu_custom_call.1} parent=0 // loop_body
    %s17 = ssub.s32 %s12, 1
    %s18 = ssub.s32 %s12, 2
    %s25 = sadd.s32 1, %s20
    %p26 = scmp.ge.s32.totalorder %s25, 1
    %s27 = scalar_select %p26, 0, %s25
    %s28 = sadd.s32 1, %s19
    %s29 = scalar_select %p26, %s28, %s19
    %p30 = scmp.ge.s32.totalorder %s29, 2
    %s31 = scalar_select %p30, 0, %s29
    %s32 = ssub.s32 %s19, %s31
    %s33 = ssub.s32 %s20, %s27
    %s34 = sor.u32 %s32, %s33
    %p35 = scmp.eq.s32.totalorder %s34, 0
    %s37 = sadd.s32 %s36, 1
    %s38 = scalar_select %p35, %s36, %s37
    %p41 = pneg %p35
    %p42 = scmp.eq.s32.totalorder %s12, 1
    %p43 = por %p41, %p42
    %p44 = scmp.ne.s32.totalorder %s36, %s39
    %p45 = scmp.eq.s32.totalorder %s12, 0
    %p46 = por %p44, %p45
    %p47 = scmp.ne.s32.totalorder %s36, %s39
    %p48 = scmp.eq.s32.totalorder %s17, 1
    %p49 = por %p47, %p48
    %p50 = scmp.ne.s32.totalorder %s39, %s40
    %p51 = scmp.eq.s32.totalorder %s17, 0
    %p52 = por %p50, %p51
    %p53 = scmp.ne.s32.totalorder %s39, %s40
    %p54 = scmp.eq.s32.totalorder %s18, 1
    %p55 = por %p53, %p54
    %p57 = scmp.ne.s32.totalorder %s40, %s56
    %p58 = scmp.eq.s32.totalorder %s18, 0
    %p59 = por %p57, %p58
    %s60 = ssub.s32 %s19, %s31
    %s61 = ssub.s32 %s20, %s27
    %s62 = sor.u32 %s60, %s61
    %p63 = scmp.eq.s32.totalorder %s62, 0
    %s65 = sadd.s32 %s64, 1
    %s66 = scalar_select %p63, %s64, %s65
    %p69 = pneg %p63
    %p70 = scmp.eq.s32.totalorder %s12, 1
    %p71 = por %p69, %p70
    %p72 = scmp.ne.s32.totalorder %s64, %s67
    %p73 = scmp.eq.s32.totalorder %s12, 0
    %p74 = por %p72, %p73
    %p75 = scmp.ne.s32.totalorder %s64, %s67
    %p76 = scmp.eq.s32.totalorder %s17, 1
    %p77 = por %p75, %p76
    %p78 = scmp.ne.s32.totalorder %s67, %s68
    %p79 = scmp.eq.s32.totalorder %s17, 0
    %p80 = por %p78, %p79
    %p81 = scmp.ne.s32.totalorder %s67, %s68
    %p82 = scmp.eq.s32.totalorder %s18, 1
    %p83 = por %p81, %p82
    %p85 = scmp.ne.s32.totalorder %s68, %s84
    %p86 = scmp.eq.s32.totalorder %s18, 0
    %p87 = por %p85, %p86
    %s89 = sadd.s32 %s88, 1
    %p92 = scmp.eq.s32.totalorder %s12, 1
    %p93 = scmp.ne.s32.totalorder %s88, %s90
    %p94 = scmp.eq.s32.totalorder %s12, 0
    %p95 = por %p93, %p94
    %p96 = scmp.ne.s32.totalorder %s88, %s90
    %p97 = scmp.eq.s32.totalorder %s17, 1
    %p98 = por %p96, %p97
    %p99 = scmp.ne.s32.totalorder %s90, %s91
    %p100 = scmp.eq.s32.totalorder %s17, 0
    %p101 = por %p99, %p100
    %p102 = scmp.ne.s32.totalorder %s90, %s91
    %p103 = scmp.eq.s32.totalorder %s18, 1
    %p104 = por %p102, %p103
    %p106 = scmp.ne.s32.totalorder %s91, %s105
    %p107 = scmp.eq.s32.totalorder %s18, 0
    %p108 = por %p106, %p107
    %s110 = sadd.s32 %s109, 1
    %p113 = scmp.eq.s32.totalorder %s12, 1
    %p114 = scmp.ne.s32.totalorder %s109, %s111
    %p115 = scmp.eq.s32.totalorder %s12, 0
    %p116 = por %p114, %p115
    %p117 = scmp.ne.s32.totalorder %s109, %s111
    %p118 = scmp.eq.s32.totalorder %s17, 1
    %p119 = por %p117, %p118
    %p120 = scmp.ne.s32.totalorder %s111, %s112
    %p121 = scmp.eq.s32.totalorder %s17, 0
    %p122 = por %p120, %p121
    %p123 = scmp.ne.s32.totalorder %s111, %s112
    %p124 = scmp.eq.s32.totalorder %s18, 1
    %p125 = por %p123, %p124
    %p127 = scmp.ne.s32.totalorder %s112, %s126
    %p128 = scmp.eq.s32.totalorder %s18, 0
    %p129 = por %p127, %p128
    %s131 = sadd.s32 %s130, 1
    %p134 = scmp.eq.s32.totalorder %s12, 1
    %p135 = scmp.ne.s32.totalorder %s130, %s132
    %p136 = scmp.eq.s32.totalorder %s12, 0
    %p137 = por %p135, %p136
    %p138 = scmp.ne.s32.totalorder %s130, %s132
    %p139 = scmp.eq.s32.totalorder %s17, 1
    %p140 = por %p138, %p139
    %p141 = scmp.ne.s32.totalorder %s132, %s133
    %p142 = scmp.eq.s32.totalorder %s17, 0
    %p143 = por %p141, %p142
    %p144 = scmp.ne.s32.totalorder %s132, %s133
    %p145 = scmp.eq.s32.totalorder %s18, 1
    %p146 = por %p144, %p145
    %p148 = scmp.ne.s32.totalorder %s133, %s147
    %p149 = scmp.eq.s32.totalorder %s18, 0
    %p150 = por %p148, %p149
    %s152 = sadd.s32 %s151, 1
    %p155 = scmp.eq.s32.totalorder %s12, 1
    %p156 = scmp.ne.s32.totalorder %s151, %s153
    %p157 = scmp.eq.s32.totalorder %s12, 0
    %p158 = por %p156, %p157
    %p159 = scmp.ne.s32.totalorder %s151, %s153
    %p160 = scmp.eq.s32.totalorder %s17, 1
    %p161 = por %p159, %p160
    %p162 = scmp.ne.s32.totalorder %s153, %s154
    %p163 = scmp.eq.s32.totalorder %s17, 0
    %p164 = por %p162, %p163
    %p165 = scmp.ne.s32.totalorder %s153, %s154
    %p166 = scmp.eq.s32.totalorder %s18, 1
    %p167 = por %p165, %p166
    %p169 = scmp.ne.s32.totalorder %s154, %s168
    %p170 = scmp.eq.s32.totalorder %s18, 0
    %p171 = por %p169, %p170
    %s172 = ssub.s32 %s19, %s31
    %s173 = ssub.s32 %s20, %s27
    %s174 = sor.u32 %s172, %s173
    %p175 = scmp.eq.s32.totalorder %s174, 0
    %s177 = sadd.s32 %s176, 1
    %s178 = scalar_select %p175, %s176, %s177
    %p181 = pneg %p175
    %p182 = scmp.eq.s32.totalorder %s12, 1
    %p183 = por %p181, %p182
    %p184 = scmp.ne.s32.totalorder %s176, %s179
    %p185 = scmp.eq.s32.totalorder %s12, 0
    %p186 = por %p184, %p185
    %p187 = scmp.ne.s32.totalorder %s176, %s179
    %p188 = scmp.eq.s32.totalorder %s17, 1
    %p189 = por %p187, %p188
    %p190 = scmp.ne.s32.totalorder %s179, %s180
    %p191 = scmp.eq.s32.totalorder %s17, 0
    %p192 = por %p190, %p191
    %p193 = scmp.ne.s32.totalorder %s179, %s180
    %p194 = scmp.eq.s32.totalorder %s18, 1
    %p195 = por %p193, %p194
    %p197 = scmp.ne.s32.totalorder %s180, %s196
    %p198 = scmp.eq.s32.totalorder %s18, 0
    %p199 = por %p197, %p198
    %p200 = scmp.le.s32.totalorder 1, %s12
    %p201 = scmp.lt.s32.totalorder %s12, 3
    %p202 = pnand %p200, %p201
    %p203 = pneg %p202
    // Predicated region
    $region9: #{tpu_custom_call.1} parent=5 // pred_check
      _
    $region10: #{tpu_custom_call.1} parent=5 // pred_check_branch
      %205 = sbr.rel (%p202) target = $region12
    $region11: #{tpu_custom_call.1} parent=5 // pred_region
      %s206 = ssub.s32 %s12, 1
      // Predicated region
      $region13: #{tpu_custom_call.1} parent=11 // pred_check
        %p207 = pneg %p101
      $region14: #{tpu_custom_call.1} parent=11 // pred_check_branch
        %209 = sbr.rel (%p207) target = $region16
      $region15: #{tpu_custom_call.1} parent=11 // pred_region
        _
      $region16: #{tpu_custom_call.1} parent=11 // pred_fallthru
        _
      // Predicated region
      $region17: #{tpu_custom_call.1} parent=11 // pred_check
        %p210 = pneg %p122
      $region18: #{tpu_custom_call.1} parent=11 // pred_check_branch
        %212 = sbr.rel (%p210) target = $region20
      $region19: #{tpu_custom_call.1} parent=11 // pred_region
        _
      $region20: #{tpu_custom_call.1} parent=11 // pred_fallthru
        _
      // Predicated region
      $region21: #{tpu_custom_call.1} parent=11 // pred_check
        %p213 = pneg %p143
      $region22: #{tpu_custom_call.1} parent=11 // pred_check_branch
        %215 = sbr.rel (%p213) target = $region24
      $region23: #{tpu_custom_call.1} parent=11 // pred_region
        _
      $region24: #{tpu_custom_call.1} parent=11 // pred_fallthru
        _
      // Predicated region
      $region25: #{tpu_custom_call.1} parent=11 // pred_check
        %p216 = pneg %p164
      $region26: #{tpu_custom_call.1} parent=11 // pred_check_branch
        %218 = sbr.rel (%p216) target = $region28
      $region27: #{tpu_custom_call.1} parent=11 // pred_region
        _
      $region28: #{tpu_custom_call.1} parent=11 // pred_fallthru
        _
    $region12: #{tpu_custom_call.1} parent=5 // pred_fallthru
      _
    %p219 = scmp.lt.s32.totalorder %s12, 2
    // Predicated region
    $region29: #{tpu_custom_call.1} parent=5 // pred_check
      %p220 = pneg %p219
    $region30: #{tpu_custom_call.1} parent=5 // pred_check_branch
      %222 = sbr.rel (%p220) target = $region32
    $region31: #{tpu_custom_call.1} parent=5 // pred_region
      // Predicated region
      $region33: #{tpu_custom_call.1} parent=31 // pred_check
        %p223 = pneg %p46
      $region34: #{tpu_custom_call.1} parent=31 // pred_check_branch
        %225 = sbr.rel (%p223) target = $region36
      $region35: #{tpu_custom_call.1} parent=31 // pred_region
        %p226 = scmp.lt.s32.totalorder %s19, 1
        %s227 = scalar_select %p226, %s19, 1
        %p228 = scmp.lt.s32.totalorder %s20, 0
        %s229 = scalar_select %p228, %s20, 0
        %s230 = sadd.s32 %s229, %s227
        %s231 = smul.addr %s230, 4
        %s232 = scalar_lea.vmem %s0, %s231
      $region36: #{tpu_custom_call.1} parent=31 // pred_fallthru
        _
      // Predicated region
      $region37: #{tpu_custom_call.1} parent=31 // pred_check
        %p233 = pneg %p74
      $region38: #{tpu_custom_call.1} parent=31 // pred_check_branch
        %235 = sbr.rel (%p233) target = $region40
      $region39: #{tpu_custom_call.1} parent=31 // pred_region
        %p236 = scmp.lt.s32.totalorder %s19, 1
        %s237 = scalar_select %p236, %s19, 1
        %p238 = scmp.lt.s32.totalorder %s20, 0
        %s239 = scalar_select %p238, %s20, 0
        %s240 = sadd.s32 %s239, %s237
        %s241 = smul.addr %s240, 8
        %s242 = scalar_lea.vmem %s1, %s241
      $region40: #{tpu_custom_call.1} parent=31 // pred_fallthru
        _
    $region32: #{tpu_custom_call.1} parent=5 // pred_fallthru
      _
    %p243 = scmp.le.s32.totalorder 1, %s12
    %p244 = scmp.lt.s32.totalorder %s12, 3
    %p245 = pnand %p243, %p244
    %p246 = pneg %p245
    // Predicated region
    $region41: #{tpu_custom_call.1} parent=5 // pred_check
      _
    $region42: #{tpu_custom_call.1} parent=5 // pred_check_branch
      %248 = sbr.rel (%p245) target = $region44
    $region43: #{tpu_custom_call.1} parent=5 // pred_region
      %s249 = ssub.s32 %s12, 1
      %p250 = scmp.lt.s32.totalorder %s21, 1
      %s251 = scalar_select %p250, %s21, 1
      %p252 = scmp.lt.s32.totalorder %s22, 0
      %s253 = scalar_select %p252, %s22, 0
      %s254 = sadd.s32 %s253, %s251
      %s255 = smul.addr %s254, 4
      %s256 = scalar_lea.vmem %s0, %s255
      %p257 = pneg %p52
      %p258 = pneg %p49
      %p259 = scmp.lt.s32.totalorder %s21, 1
      %s260 = scalar_select %p259, %s21, 1
      %p261 = scmp.lt.s32.totalorder %s22, 0
      %s262 = scalar_select %p261, %s22, 0
      %s263 = sadd.s32 %s262, %s260
      %s264 = smul.addr %s263, 8
      %s265 = scalar_lea.vmem %s1, %s264
      %p266 = pneg %p80
      %p267 = pneg %p77
      %p268 = pneg %p101
      %p269 = pneg %p98
      %p270 = pneg %p122
      %p271 = pneg %p119
      %p272 = pneg %p143
      %p273 = pneg %p140
      %p274 = pneg %p164
      %p275 = pneg %p161
      %p276 = pneg %p192
      %p277 = pneg %p189
      %p278 = scmp.lt.s32.totalorder %s21, 1
      %s279 = scalar_select %p278, %s21, 1
      %p280 = scmp.lt.s32.totalorder %s22, 0
      %s281 = scalar_select %p280, %s22, 0
      %s282 = smul.addr %s279, 4
      %s283 = sadd.s32 %s281, %s282
      %s284 = smul.addr %s283, 8
      %s285 = scalar_lea.vmem %s6, %s284
      %p286 = scmp.lt.s32.totalorder %s21, 1
      %s287 = scalar_select %p286, %s21, 1
      %p288 = scmp.lt.s32.totalorder %s22, 0
      %s289 = scalar_select %p288, %s22, 0
      %s290 = sadd.s32 %s289, %s287
      %s291 = smul.addr %s290, 4
      %s292 = scalar_lea.vmem %s0, %s291
      %p293 = scmp.lt.s32.totalorder %s21, 1
      %s294 = scalar_select %p293, %s21, 1
      %p295 = scmp.lt.s32.totalorder %s22, 0
      %s296 = scalar_select %p295, %s22, 0
      %s297 = sadd.s32 %s296, %s294
      %s298 = smul.addr %s297, 8
      %s299 = scalar_lea.vmem %s1, %s298
      %p300 = scmp.lt.s32.totalorder %s21, 1
      %s301 = scalar_select %p300, %s21, 1
      %p302 = scmp.lt.s32.totalorder %s22, 0
      %s303 = scalar_select %p302, %s22, 0
      %s304 = smul.addr %s301, 4
      %s305 = sadd.s32 %s303, %s304
      %s306 = smul.addr %s305, 8
      %s307 = scalar_lea.vmem %s6, %s306
      %v308 = vld [vmem:[%s292] sm:$0xf]
      %v309 = vld [vmem:[%s299] sm:$0xff]
      %v310 = vld [vmem:[%s2] sm:$0xff]
      %v311 = vld [vmem:[%s2 + $0x8] sm:$0xff]
      %v312 = vld [vmem:[%s2 + $0x10] sm:$0xff]
      %v313 = vld [vmem:[%s2 + $0x18] sm:$0xff]
      %v314 = vld [vmem:[%s4] sm:$0xff]
      %v315 = vld [vmem:[%s4 + $0x8] sm:$0xff]
      %v316 = vld [vmem:[%s4 + $0x10] sm:$0xff]
      %v317 = vld [vmem:[%s4 + $0x18] sm:$0xff]
      %319 = vset.pattern.permute.xlu0 0
      %320 = vperm.xlu0 %319, %v314
      %v321 = vpop.permute.xlu0 %320
      %324 = vset.pattern.permute.xlu0 0
      %325 = vperm.xlu0 %324, %v315
      %v326 = vpop.permute.xlu0 %325
      %329 = vset.pattern.permute.xlu0 0
      %330 = vperm.xlu0 %329, %v316
      %v331 = vpop.permute.xlu0 %330
      %334 = vset.pattern.permute.xlu0 0
      %335 = vperm.xlu0 %334, %v317
      %v336 = vpop.permute.xlu0 %335
      %vm338 = vcmask 31744
      %v340 = vsel %vm338, %v310, 0
      %v343 = vsel %vm338, %v311, 0
      %v346 = vsel %vm338, %v312, 0
      %v349 = vsel %vm338, %v313, 0
      %vm351 = vcmask 1043456
      %v353 = vsel %vm351, %v308, 0
      %355 = vmatpush.msra.mxu0 0.0
      %356 = vmatpush.msra.mxu0 0.0
      %357 = vmatpush.msra.mxu0 0.0
      %358 = vmatpush.msra.mxu0 0.0
      %359 = vmatpush.msra.mxu0 0.0
      %360 = vmatpush.msra.mxu0 0.0
      %361 = vmatpush.msra.mxu0 0.0
      %362 = vmatpush.msra.mxu0 0.0
      %363 = vmatpush.msra.mxu0 0.0
      %364 = vmatpush.msra.mxu0 0.0
      %365 = vmatpush.msra.mxu0 0.0
      %366 = vmatpush.msra.mxu0 0.0
      %367 = vmatpush.msra.mxu0 0.0
      %368 = vmatpush.msra.mxu0 0.0
      %369 = vmatpush.msra.mxu0 0.0
      %370 = vmatpush.msra.mxu0 %v353
      %371 = vmatmul.f32.gmra.mxu0 %v340
      %v372 = vpop.f32.mrf.mxu0
      %v373 = vadd.f32 %v321, %v372
      %374 = vmatmul.f32.gmra.mxu0 %v343
      %v375 = vpop.f32.mrf.mxu0
      %v376 = vadd.f32 %v326, %v375
      %377 = vmatmul.f32.gmra.mxu0 %v346
      %v378 = vpop.f32.mrf.mxu0
      %v379 = vadd.f32 %v331, %v378
      %380 = vmatmul.f32.gmra.mxu0 %v349
      %v381 = vpop.f32.mrf.mxu0
      %v382 = vadd.f32 %v336, %v381
      %383 = vdwg.mxu0
      %v384 = vld [vmem:[%s3] sm:$0xff]
      %v385 = vld [vmem:[%s3 + $0x8] sm:$0xff]
      %v386 = vld [vmem:[%s3 + $0x10] sm:$0xff]
      %v387 = vld [vmem:[%s3 + $0x18] sm:$0xff]
      %v388 = vld [vmem:[%s3 + $0x20] sm:$0xff]
      %v389 = vld [vmem:[%s3 + $0x28] sm:$0xff]
      %v390 = vld [vmem:[%s3 + $0x30] sm:$0xff]
      %v391 = vld [vmem:[%s3 + $0x38] sm:$0xff]
      %v392 = vld [vmem:[%s5] sm:$0xff]
      %v393 = vld [vmem:[%s5 + $0x8] sm:$0xff]
      %v394 = vld [vmem:[%s5 + $0x10] sm:$0xff]
      %v395 = vld [vmem:[%s5 + $0x18] sm:$0xff]
      %v396 = vld [vmem:[%s5 + $0x20] sm:$0xff]
      %v397 = vld [vmem:[%s5 + $0x28] sm:$0xff]
      %v398 = vld [vmem:[%s5 + $0x30] sm:$0xff]
      %v399 = vld [vmem:[%s5 + $0x38] sm:$0xff]
      %401 = vset.pattern.permute.xlu0 0
      %402 = vperm.xlu0 %401, %v392
      %v403 = vpop.permute.xlu0 %402
      %406 = vset.pattern.permute.xlu0 0
      %407 = vperm.xlu0 %406, %v393
      %v408 = vpop.permute.xlu0 %407
      %411 = vset.pattern.permute.xlu0 0
      %412 = vperm.xlu0 %411, %v394
      %v413 = vpop.permute.xlu0 %412
      %416 = vset.pattern.permute.xlu0 0
      %417 = vperm.xlu0 %416, %v395
      %v418 = vpop.permute.xlu0 %417
      %421 = vset.pattern.permute.xlu0 0
      %422 = vperm.xlu0 %421, %v396
      %v423 = vpop.permute.xlu0 %422
      %426 = vset.pattern.permute.xlu0 0
      %427 = vperm.xlu0 %426, %v397
      %v428 = vpop.permute.xlu0 %427
      %431 = vset.pattern.permute.xlu0 0
      %432 = vperm.xlu0 %431, %v398
      %v433 = vpop.permute.xlu0 %432
      %436 = vset.pattern.permute.xlu0 0
      %437 = vperm.xlu0 %436, %v399
      %v438 = vpop.permute.xlu0 %437
      %vm440 = vcmask 64512
      %v442 = vsel %vm440, %v384, 0
      %v445 = vsel %vm440, %v385, 0
      %v448 = vsel %vm440, %v386, 0
      %v451 = vsel %vm440, %v387, 0
      %v454 = vsel %vm440, %v388, 0
      %v457 = vsel %vm440, %v389, 0
      %v460 = vsel %vm440, %v390, 0
      %v463 = vsel %vm440, %v391, 0
      %465 = vmatpush.msra.mxu0 0.0
      %466 = vmatpush.msra.mxu0 0.0
      %467 = vmatpush.msra.mxu0 0.0
      %468 = vmatpush.msra.mxu0 0.0
      %469 = vmatpush.msra.mxu0 0.0
      %470 = vmatpush.msra.mxu0 0.0
      %471 = vmatpush.msra.mxu0 0.0
      %472 = vmatpush.msra.mxu0 0.0
      %473 = vmatpush.msra.mxu0 0.0
      %474 = vmatpush.msra.mxu0 0.0
      %475 = vmatpush.msra.mxu0 0.0
      %476 = vmatpush.msra.mxu0 0.0
      %477 = vmatpush.msra.mxu0 0.0
      %478 = vmatpush.msra.mxu0 0.0
      %479 = vmatpush.msra.mxu0 0.0
      %480 = vmatpush.msra.mxu0 %v309
      %481 = vmatmul.f32.gmra.mxu0 %v442
      %v482 = vpop.f32.mrf.mxu0
      %v483 = vadd.f32 %v403, %v482
      %484 = vmatmul.f32.gmra.mxu0 %v445
      %v485 = vpop.f32.mrf.mxu0
      %v486 = vadd.f32 %v408, %v485
      %487 = vmatmul.f32.gmra.mxu0 %v448
      %v488 = vpop.f32.mrf.mxu0
      %v489 = vadd.f32 %v413, %v488
      %490 = vmatmul.f32.gmra.mxu0 %v451
      %v491 = vpop.f32.mrf.mxu0
      %v492 = vadd.f32 %v418, %v491
      %493 = vmatmul.f32.gmra.mxu0 %v454
      %v494 = vpop.f32.mrf.mxu0
      %v495 = vadd.f32 %v423, %v494
      %496 = vmatmul.f32.gmra.mxu0 %v457
      %v497 = vpop.f32.mrf.mxu0
      %v498 = vadd.f32 %v428, %v497
      %499 = vmatmul.f32.gmra.mxu0 %v460
      %v500 = vpop.f32.mrf.mxu0
      %v501 = vadd.f32 %v433, %v500
      %502 = vmatmul.f32.gmra.mxu0 %v463
      %v503 = vpop.f32.mrf.mxu0
      %v504 = vadd.f32 %v438, %v503
      %505 = vdwg.mxu0
      %v506 = vmul.f32 %v483, %v373
      %v507 = vmul.f32 %v486, %v376
      %v508 = vmul.f32 %v489, %v379
      %v509 = vmul.f32 %v492, %v382
      %v510 = vadd.f32 %v506, %v495
      %v511 = vadd.f32 %v507, %v498
      %v512 = vadd.f32 %v508, %v501
      %v513 = vadd.f32 %v509, %v504
      %vm514 = vcmask 130048
      %515 = vst.msk [vmem:[%s307] sm:$0xff] %vm514, %v510
      %516 = vst.msk [vmem:[%s307 + $0x8] sm:$0xff] %vm514, %v511
      %517 = vst.msk [vmem:[%s307 + $0x10] sm:$0xff] %vm514, %v512
      %518 = vst.msk [vmem:[%s307 + $0x18] sm:$0xff] %vm514, %v513
      %p519 = scmp.lt.s32.totalorder %s21, 1
      %s520 = scalar_select %p519, %s21, 1
      %p521 = scmp.lt.s32.totalorder %s22, 0
      %s522 = scalar_select %p521, %s22, 0
      %s523 = smul.addr %s520, 4
      %s524 = sadd.s32 %s522, %s523
      %s525 = smul.addr %s524, 8
      %s526 = scalar_lea.vmem %s6, %s525
      // Predicated region
      $region45: #{tpu_custom_call.1} parent=43 // pred_check
        %p527 = pneg %p189
      $region46: #{tpu_custom_call.1} parent=43 // pred_check_branch
        %529 = sbr.rel (%p527) target = $region48
      $region47: #{tpu_custom_call.1} parent=43 // pred_region
        _
      $region48: #{tpu_custom_call.1} parent=43 // pred_fallthru
        _
    $region44: #{tpu_custom_call.1} parent=5 // pred_fallthru
      _
    %p530 = scmp.le.s32.totalorder 2, %s12
    // Predicated region
    $region49: #{tpu_custom_call.1} parent=5 // pred_check
      %p531 = pneg %p530
    $region50: #{tpu_custom_call.1} parent=5 // pred_check_branch
      %533 = sbr.rel (%p531) target = $region52
    $region51: #{tpu_custom_call.1} parent=5 // pred_region
      %s534 = ssub.s32 %s12, 2
      // Predicated region
      $region53: #{tpu_custom_call.1} parent=51 // pred_check
        %p535 = pneg %p195
      $region54: #{tpu_custom_call.1} parent=51 // pred_check_branch
        %537 = sbr.rel (%p535) target = $region56
      $region55: #{tpu_custom_call.1} parent=51 // pred_region
        %p538 = scmp.lt.s32.totalorder %s23, 1
        %s539 = scalar_select %p538, %s23, 1
        %p540 = scmp.lt.s32.totalorder %s24, 0
        %s541 = scalar_select %p540, %s24, 0
        %s542 = smul.addr %s539, 4
        %s543 = sadd.s32 %s541, %s542
        %s544 = smul.addr %s543, 8
        %s545 = scalar_lea.vmem %s6, %s544
      $region56: #{tpu_custom_call.1} parent=51 // pred_fallthru
        _
    $region52: #{tpu_custom_call.1} parent=5 // pred_fallthru
      _
  $region6: #{tpu_custom_call.1} parent=0 // loop_footer
    %s16 = sadd.s32 1, %s12
  $region7: #{tpu_custom_call.1} parent=0 // loop_footer_branch
    %11 = sbr.rel target = $region3
  $region8: #{tpu_custom_call.1} parent=0 // loop_exit
    _

</llo_original>
